<compile_context>
chip_gen: v6e
topology: v6e:2x2x1
jax: 0.10.0
libtpu: 0.0.40
codegen_flags: <defaults>
</compile_context>

<pallas_src>
import jax
import jax.numpy as jnp
from jax.experimental import pallas as pl
from jax.experimental.pallas import tpu as pltpu

LANES = 128
SUB_ROWS = 8                 # streaming granularity inside a block (8 rows = 32 KiB/input)
UNROLL = 8                   # fori_loop unroll for the full-block fast path
MIN_ROWS_PER_SPLIT = 512     # only split across TensorCores when each gets >= 2 MiB

_SUBLANES_BY_ITEMSIZE = {4: 8, 2: 16, 1: 32}   # one chunk-row == 4 KiB for every dtype


def _cdiv(a, b):
    return -(-a // b)


def _round_up(a, b):
    return _cdiv(a, b) * b


def _hw_params():
    """(num_tensorcores, max_block_rows). Detection only affects perf, never correctness."""
    kind = ""
    try:
        kind = jax.devices()[0].device_kind.lower()
    except Exception:
        pass
    # v5e: single TensorCore, small scoped-VMEM default -> 512-row (2 MiB) blocks.
    if "v5 lite" in kind or "v5e" in kind or "v5lite" in kind:
        return 1, 512
    # Dual-TensorCore devices (v4/v5p megacore, v7x) can shard the leading grid axis.
    dual_tc = any(t in kind for t in ("v4", "v5p", "v7", "7x", "tpu7"))
    return (2 if dual_tc else 1), 1024


def _l1_partial_sums(x3, y3):
    """Partial sums of |x - y| over a (rows, sublanes, 128) slab.

    Returns a (num_splits, sublanes, 128) float32 array; the caller does the final
    (tiny) reduction.  The kernel is pure HBM bandwidth; compute hides under the DMAs.
    """
    total_rows, sublanes, lanes = x3.shape
    num_cores, max_block_rows = _hw_params()

    num_splits = num_cores if (num_cores > 1 and
                               total_rows >= num_cores * MIN_ROWS_PER_SPLIT) else 1
    steps = _cdiv(total_rows, num_splits * max_block_rows)
    if num_splits * steps == 1:
        block_rows = total_rows          # one block == the whole array (always legal)
    else:
        block_rows = _round_up(_cdiv(total_rows, num_splits * steps), SUB_ROWS)

    exact = (num_splits * steps * block_rows == total_rows)
    n_sub, rem_rows_static = divmod(block_rows, SUB_ROWS)
    last_block = (total_rows - 1) // block_rows

    def _sub_sum(x_ref, y_ref, r, nrows):
        # Upcast BEFORE the subtract so bf16/f16 inputs don't lose the difference.
        xv = x_ref[pl.ds(r, nrows)].astype(jnp.float32)
        yv = y_ref[pl.ds(r, nrows)].astype(jnp.float32)
        return jnp.sum(jnp.abs(xv - yv), axis=0)

    def kernel(x_ref, y_ref, o_ref, acc_ref):
        c = pl.program_id(0)          # TensorCore split ("parallel")
        i = pl.program_id(1)          # sequential step within the split

        @pl.when(i == 0)
        def _init():
            acc_ref[...] = jnp.zeros_like(acc_ref)

        def accumulate_full_block():
            acc = acc_ref[...]
            if n_sub:
                def body(s, a):
                    r = pl.multiple_of(s * SUB_ROWS, SUB_ROWS)
                    return a + _sub_sum(x_ref, y_ref, r, SUB_ROWS)
                acc = jax.lax.fori_loop(0, n_sub, body, acc, unroll=UNROLL)
            if rem_rows_static:       # only possible for the single-exact-block case
                acc = acc + _sub_sum(x_ref, y_ref, n_sub * SUB_ROWS, rem_rows_static)
            acc_ref[...] = acc

        if exact:
            # Coverage is exact: every block is fully valid -> no masking, no guards.
            accumulate_full_block()
        else:
            valid = total_rows - (c * steps + i) * block_rows   # rows of real data

            @pl.when(valid >= block_rows)        # full block: fused, unrolled, unmasked
            def _full():
                accumulate_full_block()

            @pl.when(valid < block_rows)         # the (single) boundary block
            def _partial():
                v = jnp.maximum(valid, 0)
                n_full = v // SUB_ROWS

                def body(s, a):
                    r = pl.multiple_of(s * SUB_ROWS, SUB_ROWS)
                    return a + _sub_sum(x_ref, y_ref, r, SUB_ROWS)
                acc = jax.lax.fori_loop(0, n_full, body, acc_ref[...])

                rem = v - n_full * SUB_ROWS
                r0 = pl.multiple_of(n_full * SUB_ROWS, SUB_ROWS)
                xv = x_ref[pl.ds(r0, SUB_ROWS)].astype(jnp.float32)
                yv = y_ref[pl.ds(r0, SUB_ROWS)].astype(jnp.float32)
                # Cheap mask: (8,1,1) iota broadcast inside the where.
                row_ids = jax.lax.broadcasted_iota(jnp.int32, (SUB_ROWS, 1, 1), 0)
                masked = jnp.where(row_ids < rem, jnp.abs(xv - yv), 0.0)
                acc_ref[...] = acc + jnp.sum(masked, axis=0)

        @pl.when(i == steps - 1)
        def _finalize():
            o_ref[...] = acc_ref[...].reshape(1, sublanes, lanes)

    def in_idx(c, i):
        # Safety clamp: never point a DMA at a block starting past the array end.
        # By construction this is a no-op for realistic shapes; if it ever triggers,
        # the duplicated block's contribution is masked to zero in the kernel.
        return (jnp.minimum(c * steps + i, last_block), 0, 0)

    # 2 inputs x 2 pipeline buffers x one block (4 KiB per chunk-row) + small margin.
    block_bytes = block_rows * 4096
    vmem_limit = 4 * block_bytes + (2 << 20)

    return pl.pallas_call(
        kernel,
        out_shape=jax.ShapeDtypeStruct((num_splits, sublanes, lanes), jnp.float32),
        grid_spec=pltpu.PrefetchScalarGridSpec(
            num_scalar_prefetch=0,
            grid=(num_splits, steps),
            in_specs=[
                pl.BlockSpec((block_rows, sublanes, lanes), in_idx),
                pl.BlockSpec((block_rows, sublanes, lanes), in_idx),
            ],
            out_specs=pl.BlockSpec((1, sublanes, lanes), lambda c, i: (c, 0, 0)),
            scratch_shapes=[pltpu.VMEM((sublanes, lanes), jnp.float32)],
        ),
        compiler_params=pltpu.CompilerParams(
            dimension_semantics=("parallel", "arbitrary"),
            vmem_limit_bytes=vmem_limit,
        ),
    )(x3, y3)


@jax.jit
def video_l1_loss(orig_video, generated_video, weight=1.0):
    """mean(|generated - orig|) * weight  — JAX/Pallas equivalent of VideoL1Loss."""
    if orig_video.shape != generated_video.shape:
        raise ValueError("orig_video and generated_video must have the same shape")

    x, y = orig_video, generated_video
    if x.dtype != y.dtype:
        x = x.astype(jnp.float32)
        y = y.astype(jnp.float32)
    itemsize = jnp.dtype(x.dtype).itemsize
    if itemsize not in _SUBLANES_BY_ITEMSIZE:      # e.g. float64 -> compute in f32
        x = x.astype(jnp.float32)
        y = y.astype(jnp.float32)
        itemsize = 4
    sublanes = _SUBLANES_BY_ITEMSIZE[itemsize]
    chunk = sublanes * LANES                       # elements per 4 KiB chunk-row

    n_elems = x.size
    xf = x.reshape(-1)                             # free bitcast reshapes
    yf = y.reshape(-1)
    full_rows = n_elems // chunk
    tail = n_elems - full_rows * chunk

    total = jnp.zeros((), jnp.float32)
    if tail:
        # <4 KiB ragged tail: tiny XLA reduction instead of jnp.pad-ing (and hence
        # copying) both full flattened inputs through HBM.
        xt = xf[full_rows * chunk:].astype(jnp.float32)
        yt = yf[full_rows * chunk:].astype(jnp.float32)
        total = total + jnp.sum(jnp.abs(xt - yt))
    if full_rows:
        # Common case (tail == 0): pure bitcast reshape, zero extra HBM traffic.
        xh = xf[:full_rows * chunk] if tail else xf
        yh = yf[:full_rows * chunk] if tail else yf
        x3 = xh.reshape(full_rows, sublanes, LANES)
        y3 = yh.reshape(full_rows, sublanes, LANES)
        total = total + jnp.sum(_l1_partial_sums(x3, y3))

    mean = total / jnp.float32(n_elems)
    loss = mean * jnp.asarray(weight, dtype=jnp.float32)
    # Mirrors PyTorch: F.l1_loss(bf16, bf16) returns bf16 (accumulation stays f32).
    return loss.astype(generated_video.dtype)


class VideoL1Loss:
    """Drop-in analogue of the PyTorch module's calling convention."""

    def __init__(self, weight=1.0, device=None):
        del device                    # placement is handled by JAX's backend
        self._weight = float(weight)

    def __call__(self, orig_data, generated_data):
        orig_video, _ = orig_data
        return video_l1_loss(orig_video, generated_data, self._weight)


if __name__ == "__main__":
    key = jax.random.PRNGKey(0)
    k1, k2, k3, k4, k5, k6 = jax.random.split(key, 6)

    # 1) Small NCTHW video, f32, element count a multiple of one chunk-row.
    shape = (2, 3, 4, 16, 16)                       # 6144 elements
    o = jax.random.normal(k1, shape, dtype=jnp.float32)
    g = jax.random.normal(k2, shape, dtype=jnp.float32)
    loss_fn = VideoL1Loss(weight=1.0)
    loss = jax.block_until_ready(loss_fn((o, None), g))
    ref = jnp.mean(jnp.abs(g - o))
    assert jnp.allclose(loss, ref, rtol=1e-5, atol=1e-6), (loss, ref)

    # 2) Ragged element count (exercises the tiny-tail path) + weight != 1.
    shape2 = (2, 3, 4, 10, 10)                      # 2400 elements
    o2 = jax.random.normal(k3, shape2, dtype=jnp.float32)
    g2 = jax.random.normal(k4, shape2, dtype=jnp.float32)
    loss2 = jax.block_until_ready(video_l1_loss(o2, g2, 0.5))
    ref2 = jnp.mean(jnp.abs(g2 - o2)) * 0.5
    assert jnp.allclose(loss2, ref2, rtol=1e-5, atol=1e-6), (loss2, ref2)

    # 3) bf16 inputs: streamed at native width (16 sublanes/chunk-row), f32 accumulate.
    shape3 = (2, 3, 8, 32, 32)                      # 49152 elements
    o3 = jax.random.normal(k5, shape3, dtype=jnp.float32).astype(jnp.bfloat16)
    g3 = jax.random.normal(k6, shape3, dtype=jnp.float32).astype(jnp.bfloat16)
    loss3 = jax.block_until_ready(video_l1_loss(o3, g3, 1.0))
    ref3 = jnp.mean(jnp.abs(g3.astype(jnp.float32) - o3.astype(jnp.float32)))
    assert jnp.allclose(loss3.astype(jnp.float32), ref3, rtol=1e-2, atol=1e-3), (loss3, ref3)

    # 4) Multi-step grid with exactly-covered row range (1536 chunk-rows of f32).
    shape4 = (2, 3, 16, 128, 128)                   # 1,572,864 elements
    o4 = jax.random.normal(k1, shape4, dtype=jnp.float32)
    g4 = jax.random.normal(k2, shape4, dtype=jnp.float32)
    loss4 = jax.block_until_ready(video_l1_loss(o4, g4, 1.0))
    ref4 = jnp.mean(jnp.abs(g4 - o4))
    assert jnp.allclose(loss4, ref4, rtol=1e-4, atol=1e-5), (loss4, ref4)

    # 5) Multi-step grid whose last block straddles the end (1500 chunk-rows) —
    #    exercises the masked boundary-block path.
    shape5 = (2, 3, 10, 256, 100)                   # 1,536,000 elements
    o5 = jax.random.normal(k3, shape5, dtype=jnp.float32)
    g5 = jax.random.normal(k4, shape5, dtype=jnp.float32)
    loss5 = jax.block_until_ready(video_l1_loss(o5, g5, 2.0))
    ref5 = jnp.mean(jnp.abs(g5 - o5)) * 2.0
    assert jnp.allclose(loss5, ref5, rtol=1e-4, atol=1e-5), (loss5, ref5)

    print("KERNEL_OK")
</pallas_src>

<mosaic_0001>
module attributes {stable_mosaic.version = 11 : i64} {
  func.func @kernel(%arg0: i32, %arg1: i32, %arg2: memref<6x8x128xf32, #tpu.memory_space<vmem>>, %arg3: memref<6x8x128xf32, #tpu.memory_space<vmem>>, %arg4: memref<1x8x128xf32, #tpu.memory_space<vmem>>, %arg5: memref<8x128xf32, #tpu.memory_space<vmem>>) attributes {dimension_semantics = [#tpu.dimension_semantics<parallel>, #tpu.dimension_semantics<arbitrary>], iteration_bounds = array<i64: 1, 1>, scalar_prefetch = 0 : i64, scratch_operands = 1 : i64, tpu.core_type = #tpu.core_type<tc>, window_params = [{transform_indices = @transform_0, window_bounds = array<i64: 6, 8, 128>}, {transform_indices = @transform_1, window_bounds = array<i64: 6, 8, 128>}, {transform_indices = @transform_2, window_bounds = array<i64: 1, 8, 128>}]} {
    %c0_i32 = arith.constant 0 : i32
    %0 = arith.cmpi eq, %arg1, %c0_i32 : i32
    %1 = arith.extui %0 : i1 to i32
    %c0_i32_0 = arith.constant 0 : i32
    %2 = arith.cmpi ne, %1, %c0_i32_0 : i32
    scf.if %2 {
      %cst_12 = arith.constant 0.000000e+00 : f32
      %14 = vector.broadcast %cst_12 : f32 to vector<8x128xf32>
      %c0_13 = arith.constant 0 : index
      %c0_14 = arith.constant 0 : index
      %15 = vector.load %arg5[%c0_13, %c0_14] : memref<8x128xf32, #tpu.memory_space<vmem>>, vector<8x128xf32>
      tpu.vector_store %arg5[%c0_13, %c0_14], %14 {strides = array<i32>} : memref<8x128xf32, #tpu.memory_space<vmem>>, vector<8x128xf32>,
    } else {
    }
    %c0 = arith.constant 0 : index
    %c0_1 = arith.constant 0 : index
    %3 = vector.load %arg5[%c0, %c0_1] : memref<8x128xf32, #tpu.memory_space<vmem>>, vector<8x128xf32>
    %c0_2 = arith.constant 0 : index
    %c0_3 = arith.constant 0 : index
    %c0_4 = arith.constant 0 : index
    %4 = vector.load %arg2[%c0_2, %c0_3, %c0_4] : memref<6x8x128xf32, #tpu.memory_space<vmem>>, vector<6x8x128xf32>
    %c0_5 = arith.constant 0 : index
    %c0_6 = arith.constant 0 : index
    %c0_7 = arith.constant 0 : index
    %5 = vector.load %arg3[%c0_5, %c0_6, %c0_7] : memref<6x8x128xf32, #tpu.memory_space<vmem>>, vector<6x8x128xf32>
    %6 = arith.subf %4, %5 : vector<6x8x128xf32>
    %7 = math.absf %6 : vector<6x8x128xf32>
    %cst = arith.constant dense<0.000000e+00> : vector<8x128xf32>
    %8 = vector.multi_reduction <add>, %7, %cst [0] : vector<6x8x128xf32> to vector<8x128xf32>
    %9 = arith.addf %3, %8 : vector<8x128xf32>
    %c0_8 = arith.constant 0 : index
    %c0_9 = arith.constant 0 : index
    %10 = vector.load %arg5[%c0_8, %c0_9] : memref<8x128xf32, #tpu.memory_space<vmem>>, vector<8x128xf32>
    tpu.vector_store %arg5[%c0_8, %c0_9], %9 {strides = array<i32>} : memref<8x128xf32, #tpu.memory_space<vmem>>, vector<8x128xf32>,
    %c0_i32_10 = arith.constant 0 : i32
    %11 = arith.cmpi eq, %arg1, %c0_i32_10 : i32
    %12 = arith.extui %11 : i1 to i32
    %c0_i32_11 = arith.constant 0 : i32
    %13 = arith.cmpi ne, %12, %c0_i32_11 : i32
    scf.if %13 {
      %c0_12 = arith.constant 0 : index
      %c0_13 = arith.constant 0 : index
      %14 = vector.load %arg5[%c0_12, %c0_13] : memref<8x128xf32, #tpu.memory_space<vmem>>, vector<8x128xf32>
      %15 = vector.shape_cast %14 : vector<8x128xf32> to vector<1x8x128xf32>
      %c0_14 = arith.constant 0 : index
      %c0_15 = arith.constant 0 : index
      %c0_16 = arith.constant 0 : index
      %16 = vector.load %arg4[%c0_14, %c0_15, %c0_16] : memref<1x8x128xf32, #tpu.memory_space<vmem>>, vector<1x8x128xf32>
      tpu.vector_store %arg4[%c0_14, %c0_15, %c0_16], %15 {strides = array<i32>} : memref<1x8x128xf32, #tpu.memory_space<vmem>>, vector<1x8x128xf32>,
    } else {
    }
    return
  }
  func.func @transform_0(%arg0: i32, %arg1: i32) -> (i32, i32, i32) {
    %c1_i32 = arith.constant 1 : i32
    %0 = arith.muli %arg0, %c1_i32 : i32
    %1 = arith.addi %0, %arg1 : i32
    %c0_i32 = arith.constant 0 : i32
    %2 = arith.minsi %1, %c0_i32 : i32
    %c0_i32_0 = arith.constant 0 : i32
    %c0_i32_1 = arith.constant 0 : i32
    %c0_i32_2 = arith.constant 0 : i32
    return %2, %c0_i32_0, %c0_i32_1 : i32, i32, i32
  }
  func.func @transform_1(%arg0: i32, %arg1: i32) -> (i32, i32, i32) {
    %c1_i32 = arith.constant 1 : i32
    %0 = arith.muli %arg0, %c1_i32 : i32
    %1 = arith.addi %0, %arg1 : i32
    %c0_i32 = arith.constant 0 : i32
    %2 = arith.minsi %1, %c0_i32 : i32
    %c0_i32_0 = arith.constant 0 : i32
    %c0_i32_1 = arith.constant 0 : i32
    %c0_i32_2 = arith.constant 0 : i32
    return %2, %c0_i32_0, %c0_i32_1 : i32, i32, i32
  }
  func.func @transform_2(%arg0: i32, %arg1: i32) -> (i32, i32, i32) {
    %c0_i32 = arith.constant 0 : i32
    %c0_i32_0 = arith.constant 0 : i32
    %c0_i32_1 = arith.constant 0 : i32
    return %arg0, %c0_i32, %c0_i32_0 : i32, i32, i32
  }
}

</mosaic_0001>

<llo_original>
// kernel: video_l1_loss.1
$region0: #{video_l1_loss.1}
  #allocation0 [shape = 'u32[]', space=smem, size = 0x4, offset = 0x4, fixed_abs, tag = 'smem constant byte address 0x4 - core index']
  #allocation1 [shape = 'u32[144,128]{1,0:T(1,128)}', space=vmem, size = 0x12000, scoped, tag = 'internal scratch']
  #allocation2 [shape = 'f32[8,128]{1,0:T(8,128)}', space=vmem, size = 0x1000, scoped, tag = 'scratch operand']
  %s0 = inlined_call_operand.vmem [shape: f32[6,8,128], index: 0, kind: input, shape index: {}]
  %s1 = inlined_call_operand.vmem [shape: f32[6,8,128], index: 1, kind: input, shape index: {}]
  %s2 = inlined_call_operand.vmem [shape: f32[1,8,128], index: 2, kind: output, shape index: {}]
  %s3 = sld [smem:[#allocation0]]
  $region26: #{video_l1_loss.1} parent=0
    _
  %s5 = ssub.s32 1, %s3
  %s6 = scalar_select 0, %s5, %s3
  // Predicated region
  $region2: #{video_l1_loss.1} parent=0 // pred_check
    _
  $region3: #{video_l1_loss.1} parent=0 // pred_check_branch
    %8 = sbr.rel (0) target = $region5
  $region4: #{video_l1_loss.1} parent=0 // pred_region
    %s9 = sadd.s32 0, 0
    %p10 = scmp.lt.s32.totalorder %s9, 0
    %s11 = scalar_select %p10, %s9, 0
    %s12 = smul.u32 6, %s11
    %p13 = scmp.lt.s32.totalorder %s12, 5
    %s14 = scalar_select %p13, %s12, 5
    %s15 = smul.addr %s14, 8
    %s16 = scalar_lea.vmem %s0, %s15
    %s17 = sadd.s32 0, 0
    %p18 = scmp.lt.s32.totalorder %s17, 0
    %s19 = scalar_select %p18, %s17, 0
    %s20 = smul.u32 6, %s19
  $region5: #{video_l1_loss.1} parent=0 // pred_fallthru
    _
  // Predicated region
  $region6: #{video_l1_loss.1} parent=0 // pred_check
    _
  $region7: #{video_l1_loss.1} parent=0 // pred_check_branch
    %22 = sbr.rel (0) target = $region9
  $region8: #{video_l1_loss.1} parent=0 // pred_region
    %s23 = sadd.s32 0, 0
    %p24 = scmp.lt.s32.totalorder %s23, 0
    %s25 = scalar_select %p24, %s23, 0
    %s26 = smul.u32 6, %s25
    %p27 = scmp.lt.s32.totalorder %s26, 5
    %s28 = scalar_select %p27, %s26, 5
    %s29 = smul.addr %s28, 8
    %s30 = scalar_lea.vmem %s1, %s29
    %s31 = sadd.s32 0, 0
    %p32 = scmp.lt.s32.totalorder %s31, 0
    %s33 = scalar_select %p32, %s31, 0
    %s34 = smul.u32 6, %s33
  $region9: #{video_l1_loss.1} parent=0 // pred_fallthru
    _
  %s35 = sadd.s32 0, 0
  %p36 = scmp.lt.s32.totalorder %s35, 0
  %s37 = scalar_select %p36, %s35, 0
  %s38 = smul.u32 6, %s37
  %p39 = scmp.lt.s32.totalorder %s38, 5
  %s40 = scalar_select %p39, %s38, 5
  %s41 = smul.addr %s40, 8
  %s42 = scalar_lea.vmem %s0, %s41
  %s43 = sadd.s32 0, 0
  %p44 = scmp.lt.s32.totalorder %s43, 0
  %s45 = scalar_select %p44, %s43, 0
  %s46 = smul.u32 6, %s45
  %p47 = scmp.lt.s32.totalorder %s46, 5
  %s48 = scalar_select %p47, %s46, 5
  %s49 = smul.addr %s48, 8
  %s50 = scalar_lea.vmem %s1, %s49
  %s51 = sadd.s32 0, 0
  %p52 = scmp.lt.s32.totalorder %s51, 0
  %s53 = scalar_select %p52, %s51, 0
  %s54 = smul.u32 6, %s53
  %p55 = scmp.lt.s32.totalorder %s54, 5
  %s56 = scalar_select %p55, %s54, 5
  %s57 = smul.addr %s56, 8
  %s58 = scalar_lea.vmem %s0, %s57
  %s59 = sadd.s32 0, 0
  %p60 = scmp.lt.s32.totalorder %s59, 0
  %s61 = scalar_select %p60, %s59, 0
  %s62 = smul.u32 6, %s61
  %s63 = sadd.s32 0, 0
  %p64 = scmp.lt.s32.totalorder %s63, 0
  %s65 = scalar_select %p64, %s63, 0
  %s66 = smul.u32 6, %s65
  %p67 = scmp.lt.s32.totalorder %s66, 5
  %s68 = scalar_select %p67, %s66, 5
  %s69 = smul.addr %s68, 8
  %s70 = scalar_lea.vmem %s1, %s69
  %s71 = sadd.s32 0, 0
  %p72 = scmp.lt.s32.totalorder %s71, 0
  %s73 = scalar_select %p72, %s71, 0
  %s74 = smul.u32 6, %s73
  %p75 = scmp.eq.s32.totalorder 0, 0
  // Predicated region
  $region10: #{video_l1_loss.1} parent=0 // pred_check
    %p76 = pneg %p75
  $region11: #{video_l1_loss.1} parent=0 // pred_check_branch
    %78 = sbr.rel (%p76) target = $region13
  $region12: #{video_l1_loss.1} parent=0 // pred_region
    %79 = vst [vmem:[#allocation2] sm:$0xff] 0.0
  $region13: #{video_l1_loss.1} parent=0 // pred_fallthru
    _
  %v80 = vld [vmem:[#allocation2] sm:$0xff]
  %v81 = vld [vmem:[%s58] sm:$0xff]
  %v82 = vld [vmem:[%s58 + $0x8] sm:$0xff]
  %v83 = vld [vmem:[%s58 + $0x10] sm:$0xff]
  %v84 = vld [vmem:[%s58 + $0x18] sm:$0xff]
  %v85 = vld [vmem:[%s58 + $0x20] sm:$0xff]
  %v86 = vld [vmem:[%s58 + $0x28] sm:$0xff]
  %v87 = vld [vmem:[%s70] sm:$0xff]
  %v88 = vld [vmem:[%s70 + $0x8] sm:$0xff]
  %v89 = vld [vmem:[%s70 + $0x10] sm:$0xff]
  %v90 = vld [vmem:[%s70 + $0x18] sm:$0xff]
  %v91 = vld [vmem:[%s70 + $0x20] sm:$0xff]
  %v92 = vld [vmem:[%s70 + $0x28] sm:$0xff]
  %v93 = vsub.f32 %v81, %v87
  %v94 = vsub.f32 %v82, %v88
  %v95 = vsub.f32 %v83, %v89
  %v96 = vsub.f32 %v84, %v90
  %v97 = vsub.f32 %v85, %v91
  %v98 = vsub.f32 %v86, %v92
  %v99 = vand.u32 2147483647, %v93
  %v100 = vand.u32 2147483647, %v94
  %v101 = vand.u32 2147483647, %v95
  %v102 = vand.u32 2147483647, %v96
  %v103 = vand.u32 2147483647, %v97
  %v104 = vand.u32 2147483647, %v98
  %v105 = vadd.f32 %v99, %v100
  %v106 = vadd.f32 %v105, %v101
  %v107 = vadd.f32 %v106, %v102
  %v108 = vadd.f32 %v107, %v103
  %v109 = vadd.f32 %v108, %v104
  %v110 = vadd.f32 %v80, %v109
  %111 = vst [vmem:[#allocation2] sm:$0xff] %v110
  // Predicated region
  $region14: #{video_l1_loss.1} parent=0 // pred_check
    %p112 = pneg %p75
  $region15: #{video_l1_loss.1} parent=0 // pred_check_branch
    %114 = sbr.rel (%p112) target = $region17
  $region16: #{video_l1_loss.1} parent=0 // pred_region
    %v115 = vld [vmem:[#allocation2] sm:$0xff]
    %116 = vst [vmem:[%s2] sm:$0xff] %v115
  $region17: #{video_l1_loss.1} parent=0 // pred_fallthru
    _
  // Predicated region
  $region18: #{video_l1_loss.1} parent=0 // pred_check
    _
  $region19: #{video_l1_loss.1} parent=0 // pred_check_branch
    %118 = sbr.rel (0) target = $region21
  $region20: #{video_l1_loss.1} parent=0 // pred_region
    _
  $region21: #{video_l1_loss.1} parent=0 // pred_fallthru
    _
  // Predicated region
  $region22: #{video_l1_loss.1} parent=0 // pred_check
    _
  $region23: #{video_l1_loss.1} parent=0 // pred_check_branch
    %120 = sbr.rel (0) target = $region25
  $region24: #{video_l1_loss.1} parent=0 // pred_region
    _
  $region25: #{video_l1_loss.1} parent=0 // pred_fallthru
    _

</llo_original>
